<compile_context>
chip_gen: v6e
topology: v6e:2x2x1
jax: 0.10.0
libtpu: 0.0.40
codegen_flags: <defaults>
</compile_context>

<pallas_src>
import functools

import jax
import jax.numpy as jnp
from jax.experimental import pallas as pl
from jax.experimental.pallas import tpu as pltpu


def _pick_batch_block(batch: int, seq: int, dim: int, num_heads: int, *,
                      target_rows: int = 256,
                      vmem_budget: int = 24 * 1024 * 1024) -> int:
    """Batches per grid step: aim for >=256 rows per step (fills the 256-wide
    MXU M dim on v6e/v7x) subject to a VMEM budget, and capped at B//2 so the
    'parallel' grid axis has at least two steps (v7x megacore)."""
    head_dim = dim // num_heads

    def est_bytes(bb: int) -> int:
        rows, g = bb * seq, bb * num_heads
        io = 2 * 2 * rows * dim * 4                      # x/out blocks, double-buffered
        qkv = rows * 3 * dim * (2 + 4)                   # bf16 qkv + f32 accumulation
        scores = 2 * g * seq * seq * 4                   # s and exp(s) in f32
        pv = g * seq * head_dim * (4 + 2)                # attn@v out (f32 + bf16)
        ctx = rows * dim * (2 + 4)                       # merged ctx + f32 out-proj acc
        wts = 2 * (dim * 3 * dim + dim * dim) * 2        # bf16 weights, double-buffered
        return io + qkv + scores + pv + ctx + wts

    cap = max(1, batch // 2)                             # >=2 grid steps when B >= 2
    best = 1
    for d in range(1, cap + 1):
        if batch % d:
            continue
        if est_bytes(d) > vmem_budget:
            break
        best = d
        if d * seq >= target_rows:
            break
    return best


def _attention_kernel(x_ref, wqkv_ref, wp_ref, b_ref, o_ref, *,
                      num_heads: int, head_dim: int):
    bb, n, c = x_ref.shape                   # (batch_block, N, C)
    rows = bb * n
    g = bb * num_heads
    hd = head_dim

    # (bb, N, C) -> (rows, C): major-dim merge only; feed the MXU in bf16.
    x2d = x_ref[...].reshape(rows, c).astype(jnp.bfloat16)

    # Fused dense QKV projection: (rows, C) @ (C, 3C), f32 accumulate,
    # cast to bf16 once at production.  Scale is pre-folded into the Q columns.
    qkv = jnp.dot(x2d, wqkv_ref[...],
                  preferred_element_type=jnp.float32).astype(jnp.bfloat16)

    # Per-head group views (g = bb*H) for the scores / attn@v stage only:
    # static lane slices + major-dim stack (no transposes, no lane-split reshape).
    def head_groups(type_idx: int):
        base = type_idx * c
        parts = [
            qkv[:, base + h * hd: base + (h + 1) * hd].reshape(bb, 1, n, hd)
            for h in range(num_heads)
        ]
        return jnp.concatenate(parts, axis=1).reshape(g, n, hd)

    q = head_groups(0)                       # (g, N, hd) bf16, already scaled
    k = head_groups(1)
    v = head_groups(2)

    # Scores: contract head_dim directly (no explicit k transpose), f32 acc.
    s = jnp.einsum("gnd,gmd->gnm", q, k, preferred_element_type=jnp.float32)

    # Softmax in f32 (VPU/EUP); EUP approx reciprocal instead of a divide.
    m = jnp.max(s, axis=-1, keepdims=True)
    e = jnp.exp(s - m)
    p = e * pl.reciprocal(jnp.sum(e, axis=-1, keepdims=True), approx=True)

    # attn @ v, batched over (batch, head) groups; probabilities fed as bf16.
    o = jnp.einsum("gnm,gmd->gnd", p.astype(jnp.bfloat16), v,
                   preferred_element_type=jnp.float32)          # (g, N, hd)

    # Merge heads back into the lane dim (lane concat, column order h*hd+d),
    # then ONE dense out-projection with full-C contraction.
    o = o.astype(jnp.bfloat16).reshape(bb, num_heads, n, hd)
    ctx = jnp.concatenate([o[:, h] for h in range(num_heads)],
                          axis=-1).reshape(rows, c)              # (rows, C)
    y = jnp.dot(ctx, wp_ref[...], preferred_element_type=jnp.float32)
    y = y + b_ref[...]                                           # (1, C) bias
    o_ref[...] = y.reshape(bb, n, c).astype(o_ref.dtype)


def prepare_attention_params(w_qkv, w_proj, b_proj, *, num_heads: int):
    """One-time parameter prep (do this at load time, not per call):
    transpose/cast nn.Linear weights into kernel layout and fold the
    1/sqrt(head_dim) scale into the Q columns of the fused QKV weight."""
    three_c, c = w_qkv.shape
    assert three_c == 3 * c and c % num_heads == 0
    head_dim = c // num_heads
    scale = head_dim ** -0.5

    # nn.Linear computes x @ W^T; fused output column j = t*C + h*hd + d.
    wqkv_t = jnp.transpose(w_qkv).astype(jnp.float32)            # (C, 3C)
    col_scale = jnp.concatenate(
        [jnp.full((c,), scale, jnp.float32), jnp.ones((2 * c,), jnp.float32)])
    wqkv_t = (wqkv_t * col_scale[None, :]).astype(jnp.bfloat16)  # scale in Q cols
    wp_t = jnp.transpose(w_proj).astype(jnp.bfloat16)            # (C, C)
    bias = b_proj.reshape(1, c).astype(jnp.float32)              # (1, C)
    return wqkv_t, wp_t, bias


def attention_pallas(x, wqkv_t, wp_t, bias, *, num_heads: int, mask=None):
    """x: (B, N, C); wqkv_t: (C, 3C); wp_t: (C, C); bias: (1, C)."""
    if mask is not None:
        # TODO(synk): pre/post-softmax mask branch of the module is not implemented.
        raise NotImplementedError("mask is not supported by this Pallas kernel")

    B, N, C = x.shape
    assert C % num_heads == 0
    head_dim = C // num_heads

    bb = _pick_batch_block(B, N, C, num_heads)
    grid = (B // bb,)

    kernel = functools.partial(_attention_kernel,
                               num_heads=num_heads, head_dim=head_dim)

    return pl.pallas_call(
        kernel,
        out_shape=jax.ShapeDtypeStruct((B, N, C), x.dtype),
        grid_spec=pltpu.PrefetchScalarGridSpec(
            num_scalar_prefetch=0,
            grid=grid,
            in_specs=[
                pl.BlockSpec((bb, N, C), lambda i: (i, 0, 0)),
                # Grid-invariant weight/bias blocks (constant index_map).
                pl.BlockSpec((C, 3 * C), lambda i: (0, 0)),
                pl.BlockSpec((C, C), lambda i: (0, 0)),
                pl.BlockSpec((1, C), lambda i: (0, 0)),
            ],
            out_specs=pl.BlockSpec((bb, N, C), lambda i: (i, 0, 0)),
        ),
        compiler_params=pltpu.CompilerParams(
            dimension_semantics=("parallel",),
            # Explicit scoped-VMEM limit; well under every generation's physical
            # VMEM (64 MiB on v7x) and above this kernel's budgeted footprint.
            vmem_limit_bytes=48 * 1024 * 1024,
        ),
    )(x, wqkv_t, wp_t, bias)


def attention_reference(x, w_qkv, w_proj, b_proj, *, num_heads: int):
    """Pure-JAX f32 reference mirroring the PyTorch forward (mask=None)."""
    B, N, C = x.shape
    hd = C // num_heads
    scale = hd ** -0.5
    qkv = jnp.einsum("bnc,dc->bnd", x, w_qkv)                     # (B, N, 3C)
    qkv = qkv.reshape(B, N, 3, num_heads, hd).transpose(2, 0, 3, 1, 4)
    q, k, v = qkv[0], qkv[1], qkv[2]                              # (B, H, N, hd)
    attn = jnp.einsum("bhnd,bhmd->bhnm", q, k) * scale
    attn = jax.nn.softmax(attn, axis=-1)
    out = jnp.einsum("bhnm,bhmd->bhnd", attn, v)                  # (B, H, N, hd)
    out = out.transpose(0, 2, 1, 3).reshape(B, N, C)
    return jnp.einsum("bnc,dc->bnd", out, w_proj) + b_proj


if __name__ == "__main__":
    # Small shapes consistent with the module: B=2, N=8 tokens, dim C=32, 4 heads.
    B, N, C = 2, 8, 32
    num_heads = 4

    key = jax.random.PRNGKey(0)
    kx, kqkv, kproj, kb = jax.random.split(key, 4)

    x = jax.random.normal(kx, (B, N, C), dtype=jnp.float32)
    w_qkv = jax.random.normal(kqkv, (3 * C, C), dtype=jnp.float32) * (C ** -0.5)
    w_proj = jax.random.normal(kproj, (C, C), dtype=jnp.float32) * (C ** -0.5)
    b_proj = jax.random.normal(kb, (C,), dtype=jnp.float32) * 0.01

    # One-time weight prep (hoisted out of the per-call path).
    wqkv_t, wp_t, bias = prepare_attention_params(w_qkv, w_proj, b_proj,
                                                  num_heads=num_heads)

    out = attention_pallas(x, wqkv_t, wp_t, bias, num_heads=num_heads)
    out = jax.block_until_ready(out)

    ref = attention_reference(x, w_qkv, w_proj, b_proj, num_heads=num_heads)
    assert out.shape == (B, N, C)
    # Tolerance sized for bf16 MXU operands + EUP approx reciprocal (tightened
    # from 1e-1 per review; approx reciprocal adds ~2^-12 relative error).
    assert jnp.allclose(out, ref, atol=3e-2, rtol=3e-2), (
        f"max abs err {jnp.max(jnp.abs(out - ref))}")

    print("KERNEL_OK")
</pallas_src>

<mosaic_0001>
module attributes {stable_mosaic.version = 11 : i64} {
  func.func @_attention_kernel(%arg0: i32, %arg1: memref<1x8x32xf32, #tpu.memory_space<vmem>>, %arg2: memref<32x96xbf16, #tpu.memory_space<vmem>>, %arg3: memref<32x32xbf16, #tpu.memory_space<vmem>>, %arg4: memref<1x32xf32, #tpu.memory_space<vmem>>, %arg5: memref<1x8x32xf32, #tpu.memory_space<vmem>>) attributes {dimension_semantics = [#tpu.dimension_semantics<parallel>], iteration_bounds = array<i64: 2>, scalar_prefetch = 0 : i64, scratch_operands = 0 : i64, tpu.core_type = #tpu.core_type<tc>, window_params = [{transform_indices = @transform_0, window_bounds = array<i64: 1, 8, 32>}, {pipeline_mode = #tpu.pipeline_mode<synchronous>, transform_indices = @transform_1, window_bounds = array<i64: 32, 96>}, {pipeline_mode = #tpu.pipeline_mode<synchronous>, transform_indices = @transform_2, window_bounds = array<i64: 32, 32>}, {pipeline_mode = #tpu.pipeline_mode<synchronous>, transform_indices = @transform_3, window_bounds = array<i64: 1, 32>}, {transform_indices = @transform_4, window_bounds = array<i64: 1, 8, 32>}]} {
    %c0 = arith.constant 0 : index
    %c0_0 = arith.constant 0 : index
    %c0_1 = arith.constant 0 : index
    %0 = vector.load %arg1[%c0, %c0_0, %c0_1] : memref<1x8x32xf32, #tpu.memory_space<vmem>>, vector<1x8x32xf32>
    %1 = vector.shape_cast %0 : vector<1x8x32xf32> to vector<8x32xf32>
    %2 = arith.truncf %1 : vector<8x32xf32> to vector<8x32xbf16>
    %c0_2 = arith.constant 0 : index
    %c0_3 = arith.constant 0 : index
    %3 = vector.load %arg2[%c0_2, %c0_3] : memref<32x96xbf16, #tpu.memory_space<vmem>>, vector<32x96xbf16>
    %cst = arith.constant dense<0.000000e+00> : vector<8x96xf32>
    %4 = tpu.matmul %2, %3, %cst {dimension_numbers = #tpu.dot_dimension_numbers<[1], [0], [0], [1], [0, 0, 1, 1], [], []>} : vector<8x32xbf16>, vector<32x96xbf16>, vector<8x96xf32> -> vector<8x96xf32>
    %5 = arith.truncf %4 : vector<8x96xf32> to vector<8x96xbf16>
    %6 = vector.extract_strided_slice %5 {offsets = [0, 0], sizes = [8, 8], strides = [1, 1]} : vector<8x96xbf16> to vector<8x8xbf16>
    %7 = vector.shape_cast %6 : vector<8x8xbf16> to vector<1x1x8x8xbf16>
    %8 = vector.extract_strided_slice %5 {offsets = [0, 8], sizes = [8, 8], strides = [1, 1]} : vector<8x96xbf16> to vector<8x8xbf16>
    %9 = vector.shape_cast %8 : vector<8x8xbf16> to vector<1x1x8x8xbf16>
    %10 = vector.extract_strided_slice %5 {offsets = [0, 16], sizes = [8, 8], strides = [1, 1]} : vector<8x96xbf16> to vector<8x8xbf16>
    %11 = vector.shape_cast %10 : vector<8x8xbf16> to vector<1x1x8x8xbf16>
    %12 = vector.extract_strided_slice %5 {offsets = [0, 24], sizes = [8, 8], strides = [1, 1]} : vector<8x96xbf16> to vector<8x8xbf16>
    %13 = vector.shape_cast %12 : vector<8x8xbf16> to vector<1x1x8x8xbf16>
    %14 = tpu.concatenate %7, %9, %11, %13 in 1 : vector<1x1x8x8xbf16>, vector<1x1x8x8xbf16>, vector<1x1x8x8xbf16>, vector<1x1x8x8xbf16> -> vector<1x4x8x8xbf16>
    %15 = vector.shape_cast %14 : vector<1x4x8x8xbf16> to vector<4x8x8xbf16>
    %16 = vector.extract_strided_slice %5 {offsets = [0, 32], sizes = [8, 8], strides = [1, 1]} : vector<8x96xbf16> to vector<8x8xbf16>
    %17 = vector.shape_cast %16 : vector<8x8xbf16> to vector<1x1x8x8xbf16>
    %18 = vector.extract_strided_slice %5 {offsets = [0, 40], sizes = [8, 8], strides = [1, 1]} : vector<8x96xbf16> to vector<8x8xbf16>
    %19 = vector.shape_cast %18 : vector<8x8xbf16> to vector<1x1x8x8xbf16>
    %20 = vector.extract_strided_slice %5 {offsets = [0, 48], sizes = [8, 8], strides = [1, 1]} : vector<8x96xbf16> to vector<8x8xbf16>
    %21 = vector.shape_cast %20 : vector<8x8xbf16> to vector<1x1x8x8xbf16>
    %22 = vector.extract_strided_slice %5 {offsets = [0, 56], sizes = [8, 8], strides = [1, 1]} : vector<8x96xbf16> to vector<8x8xbf16>
    %23 = vector.shape_cast %22 : vector<8x8xbf16> to vector<1x1x8x8xbf16>
    %24 = tpu.concatenate %17, %19, %21, %23 in 1 : vector<1x1x8x8xbf16>, vector<1x1x8x8xbf16>, vector<1x1x8x8xbf16>, vector<1x1x8x8xbf16> -> vector<1x4x8x8xbf16>
    %25 = vector.shape_cast %24 : vector<1x4x8x8xbf16> to vector<4x8x8xbf16>
    %26 = vector.extract_strided_slice %5 {offsets = [0, 64], sizes = [8, 8], strides = [1, 1]} : vector<8x96xbf16> to vector<8x8xbf16>
    %27 = vector.shape_cast %26 : vector<8x8xbf16> to vector<1x1x8x8xbf16>
    %28 = vector.extract_strided_slice %5 {offsets = [0, 72], sizes = [8, 8], strides = [1, 1]} : vector<8x96xbf16> to vector<8x8xbf16>
    %29 = vector.shape_cast %28 : vector<8x8xbf16> to vector<1x1x8x8xbf16>
    %30 = vector.extract_strided_slice %5 {offsets = [0, 80], sizes = [8, 8], strides = [1, 1]} : vector<8x96xbf16> to vector<8x8xbf16>
    %31 = vector.shape_cast %30 : vector<8x8xbf16> to vector<1x1x8x8xbf16>
    %32 = vector.extract_strided_slice %5 {offsets = [0, 88], sizes = [8, 8], strides = [1, 1]} : vector<8x96xbf16> to vector<8x8xbf16>
    %33 = vector.shape_cast %32 : vector<8x8xbf16> to vector<1x1x8x8xbf16>
    %34 = tpu.concatenate %27, %29, %31, %33 in 1 : vector<1x1x8x8xbf16>, vector<1x1x8x8xbf16>, vector<1x1x8x8xbf16>, vector<1x1x8x8xbf16> -> vector<1x4x8x8xbf16>
    %35 = vector.shape_cast %34 : vector<1x4x8x8xbf16> to vector<4x8x8xbf16>
    "tpu.trace_start"() <{level = 10 : i32, message = "gnd,gmd->gnm"}> : () -> ()
    %cst_4 = arith.constant dense<0.000000e+00> : vector<4x8x8xf32>
    %36 = tpu.matmul %15, %25, %cst_4 {dimension_numbers = #tpu.dot_dimension_numbers<[2], [2], [1], [1], [0, 0, 0, 1, 1, 1], [0], [0]>} : vector<4x8x8xbf16>, vector<4x8x8xbf16>, vector<4x8x8xf32> -> vector<4x8x8xf32>
    "tpu.trace_stop"() : () -> ()
    %cst_5 = arith.constant dense<0xFF800000> : vector<4x8xf32>
    %37 = vector.multi_reduction <maximumf>, %36, %cst_5 [2] : vector<4x8x8xf32> to vector<4x8xf32>
    %38 = vector.shape_cast %37 : vector<4x8xf32> to vector<4x8x1xf32>
    %39 = vector.broadcast %38 : vector<4x8x1xf32> to vector<4x8x8xf32>
    %40 = arith.subf %36, %39 : vector<4x8x8xf32>
    %41 = math.exp %40 : vector<4x8x8xf32>
    %cst_6 = arith.constant dense<0.000000e+00> : vector<4x8xf32>
    %42 = vector.multi_reduction <add>, %41, %cst_6 [2] : vector<4x8x8xf32> to vector<4x8xf32>
    %43 = vector.shape_cast %42 : vector<4x8xf32> to vector<4x8x1xf32>
    %44 = tpu.reciprocal %43 {approx = true} : vector<4x8x1xf32> -> vector<4x8x1xf32>
    %45 = vector.broadcast %44 : vector<4x8x1xf32> to vector<4x8x8xf32>
    %46 = arith.mulf %41, %45 : vector<4x8x8xf32>
    %47 = arith.truncf %46 : vector<4x8x8xf32> to vector<4x8x8xbf16>
    "tpu.trace_start"() <{level = 10 : i32, message = "gnm,gmd->gnd"}> : () -> ()
    %cst_7 = arith.constant dense<0.000000e+00> : vector<4x8x8xf32>
    %48 = tpu.matmul %47, %35, %cst_7 {dimension_numbers = #tpu.dot_dimension_numbers<[2], [1], [1], [2], [0, 0, 0, 1, 1, 2], [0], [0]>} : vector<4x8x8xbf16>, vector<4x8x8xbf16>, vector<4x8x8xf32> -> vector<4x8x8xf32>
    "tpu.trace_stop"() : () -> ()
    %49 = arith.truncf %48 : vector<4x8x8xf32> to vector<4x8x8xbf16>
    %50 = vector.shape_cast %49 : vector<4x8x8xbf16> to vector<1x4x8x8xbf16>
    %51 = vector.extract_strided_slice %50 {offsets = [0, 0, 0, 0], sizes = [1, 1, 8, 8], strides = [1, 1, 1, 1]} : vector<1x4x8x8xbf16> to vector<1x1x8x8xbf16>
    %52 = vector.shape_cast %51 : vector<1x1x8x8xbf16> to vector<1x8x8xbf16>
    %53 = vector.extract_strided_slice %50 {offsets = [0, 1, 0, 0], sizes = [1, 1, 8, 8], strides = [1, 1, 1, 1]} : vector<1x4x8x8xbf16> to vector<1x1x8x8xbf16>
    %54 = vector.shape_cast %53 : vector<1x1x8x8xbf16> to vector<1x8x8xbf16>
    %55 = vector.extract_strided_slice %50 {offsets = [0, 2, 0, 0], sizes = [1, 1, 8, 8], strides = [1, 1, 1, 1]} : vector<1x4x8x8xbf16> to vector<1x1x8x8xbf16>
    %56 = vector.shape_cast %55 : vector<1x1x8x8xbf16> to vector<1x8x8xbf16>
    %57 = vector.extract_strided_slice %50 {offsets = [0, 3, 0, 0], sizes = [1, 1, 8, 8], strides = [1, 1, 1, 1]} : vector<1x4x8x8xbf16> to vector<1x1x8x8xbf16>
    %58 = vector.shape_cast %57 : vector<1x1x8x8xbf16> to vector<1x8x8xbf16>
    %59 = tpu.concatenate %52, %54, %56, %58 in 2 : vector<1x8x8xbf16>, vector<1x8x8xbf16>, vector<1x8x8xbf16>, vector<1x8x8xbf16> -> vector<1x8x32xbf16>
    %60 = vector.shape_cast %59 : vector<1x8x32xbf16> to vector<8x32xbf16>
    %c0_8 = arith.constant 0 : index
    %c0_9 = arith.constant 0 : index
    %61 = vector.load %arg3[%c0_8, %c0_9] : memref<32x32xbf16, #tpu.memory_space<vmem>>, vector<32x32xbf16>
    %cst_10 = arith.constant dense<0.000000e+00> : vector<8x32xf32>
    %62 = tpu.matmul %60, %61, %cst_10 {dimension_numbers = #tpu.dot_dimension_numbers<[1], [0], [0], [1], [0, 0, 1, 1], [], []>} : vector<8x32xbf16>, vector<32x32xbf16>, vector<8x32xf32> -> vector<8x32xf32>
    %c0_11 = arith.constant 0 : index
    %c0_12 = arith.constant 0 : index
    %63 = vector.load %arg4[%c0_11, %c0_12] : memref<1x32xf32, #tpu.memory_space<vmem>>, vector<1x32xf32>
    %64 = vector.broadcast %63 : vector<1x32xf32> to vector<8x32xf32>
    %65 = arith.addf %62, %64 : vector<8x32xf32>
    %66 = vector.shape_cast %65 : vector<8x32xf32> to vector<1x8x32xf32>
    %c0_13 = arith.constant 0 : index
    %c0_14 = arith.constant 0 : index
    %c0_15 = arith.constant 0 : index
    %67 = vector.load %arg5[%c0_13, %c0_14, %c0_15] : memref<1x8x32xf32, #tpu.memory_space<vmem>>, vector<1x8x32xf32>
    tpu.vector_store %arg5[%c0_13, %c0_14, %c0_15], %66 {strides = array<i32>} : memref<1x8x32xf32, #tpu.memory_space<vmem>>, vector<1x8x32xf32>,
    return
  }
  func.func @transform_0(%arg0: i32) -> (i32, i32, i32) {
    %c0_i32 = arith.constant 0 : i32
    %c0_i32_0 = arith.constant 0 : i32
    %c0_i32_1 = arith.constant 0 : i32
    return %arg0, %c0_i32, %c0_i32_0 : i32, i32, i32
  }
  func.func @transform_1(%arg0: i32) -> (i32, i32) {
    %c0_i32 = arith.constant 0 : i32
    %c0_i32_0 = arith.constant 0 : i32
    %c0_i32_1 = arith.constant 0 : i32
    return %c0_i32, %c0_i32_0 : i32, i32
  }
  func.func @transform_2(%arg0: i32) -> (i32, i32) {
    %c0_i32 = arith.constant 0 : i32
    %c0_i32_0 = arith.constant 0 : i32
    %c0_i32_1 = arith.constant 0 : i32
    return %c0_i32, %c0_i32_0 : i32, i32
  }
  func.func @transform_3(%arg0: i32) -> (i32, i32) {
    %c0_i32 = arith.constant 0 : i32
    %c0_i32_0 = arith.constant 0 : i32
    %c0_i32_1 = arith.constant 0 : i32
    return %c0_i32, %c0_i32_0 : i32, i32
  }
  func.func @transform_4(%arg0: i32) -> (i32, i32, i32) {
    %c0_i32 = arith.constant 0 : i32
    %c0_i32_0 = arith.constant 0 : i32
    %c0_i32_1 = arith.constant 0 : i32
    return %arg0, %c0_i32, %c0_i32_0 : i32, i32, i32
  }
}

</mosaic_0001>

<llo_original>
// kernel: tpu_custom_call.1
$region0: #{tpu_custom_call.1}
  #allocation0 [shape = 'u32[]', space=smem, size = 0x4, offset = 0x4, fixed_abs, tag = 'smem constant byte address 0x4 - core index']
  #allocation1 [shape = 'u32[144,128]{1,0:T(1,128)}', space=vmem, size = 0x12000, scoped, tag = 'internal scratch']
  %s0 = inlined_call_operand.hbm [shape: f32[2,8,32], index: 0, kind: input, shape index: {}]
  %s1 = inlined_call_operand.hbm [shape: bf16[32,96], index: 1, kind: input, shape index: {}]
  %s2 = inlined_call_operand.hbm [shape: bf16[32,32], index: 2, kind: input, shape index: {}]
  %s3 = inlined_call_operand.vmem [shape: f32[1,32], index: 3, kind: input, shape index: {}]
  %s4 = inlined_call_operand.hbm [shape: f32[2,8,32], index: 4, kind: output, shape index: {}]
  %s5 = sld [smem:[#allocation0]]
  $region61: #{tpu_custom_call.1} parent=0
    _
  %s7 = ssub.s32 1, %s5
  %s8 = scalar_select 0, %s7, %s5
  $region1: #{tpu_custom_call.1} parent=0
    #allocation2 [shape = 'u8[8192]{0}', space=vmem, size = 0x2000, scoped, tag = 'input window, operand 0']
    #allocation3 [shape = 's32[2]{0}', space=sflag, size = 0x8, scoped, tag = 'scoped memory for tpu_custom_call.1']
    #allocation4 [shape = 's32[2]{0}', space=sflag, size = 0x8, scoped, tag = 'scoped memory for tpu_custom_call.1']
    #allocation5 [shape = 'u8[8192]{0}', space=vmem, size = 0x2000, scoped, tag = 'input window, operand 1, single buffered']
    #allocation6 [shape = 's32[1]{0}', space=sflag, size = 0x4, scoped, tag = 'scoped memory for tpu_custom_call.1']
    #allocation7 [shape = 'u8[8192]{0}', space=vmem, size = 0x2000, scoped, tag = 'input window, operand 2, single buffered']
    #allocation8 [shape = 'u8[8192]{0}', space=vmem, size = 0x2000, scoped, tag = 'output window, operand 0']
    %9 = vsyncpa [#allocation3], 0
    %s10 = scalar_lea.sflag [#allocation3], 1
    %11 = vsyncpa %s10, 0
    %12 = vsyncpa [#allocation6], 0
    %13 = vsyncpa [#allocation4], 0
    %s14 = scalar_lea.sflag [#allocation4], 1
    %15 = vsyncpa %s14, 0
    loop: start=0, step=1, limit=4
    $region2: #{tpu_custom_call.1} parent=1 // loop_pre_header
      _
    $region3: #{tpu_custom_call.1} parent=1 // loop_header
      %s17 = sphi 0, %s21
      %p18 = scmp.ge.s32.totalorder %s17, 4
      %s27 = sphi 0, %s29
      %s30 = sphi 0, %s27
      %s31 = sphi 0, %s30
      %s47 = sphi 0, %s31
      %s51 = sphi 0, %s51
      %s53 = sphi 0, %s51
      %s54 = sphi 0, %s53
      %s68 = sphi 0, %s54
      %s72 = sphi 0, %s72
      %s74 = sphi 0, %s72
      %s75 = sphi 0, %s74
      %s89 = sphi 0, %s75
      %s93 = sphi 0, %s93
      %s95 = sphi 0, %s93
      %s96 = sphi 0, %s95
      %s110 = sphi 0, %s96
      %s116 = sphi 0, %s118
      %s119 = sphi 0, %s116
      %s120 = sphi 0, %s119
      %s136 = sphi 0, %s120
    $region4: #{tpu_custom_call.1} parent=1 // loop_header_branch
      %20 = sbr.rel (%p18) target = $region8
    $region5: #{tpu_custom_call.1} parent=1 // loop_body
      %s22 = ssub.s32 %s17, 1
      %s23 = ssub.s32 %s17, 2
      %s24 = sadd.s32 %s17, 1
      %s25 = ssub.s32 %s17, %s24
      %p26 = scmp.eq.s32.totalorder %s25, 0
      %s28 = sadd.s32 %s27, 1
      %s29 = scalar_select %p26, %s27, %s28
      %p32 = pneg %p26
      %p33 = scmp.eq.s32.totalorder %s17, 1
      %p34 = por %p32, %p33
      %p35 = scmp.ne.s32.totalorder %s27, %s30
      %p36 = scmp.eq.s32.totalorder %s17, 0
      %p37 = por %p35, %p36
      %p38 = scmp.ne.s32.totalorder %s27, %s30
      %p39 = scmp.eq.s32.totalorder %s22, 1
      %p40 = por %p38, %p39
      %p41 = scmp.ne.s32.totalorder %s30, %s31
      %p42 = scmp.eq.s32.totalorder %s22, 0
      %p43 = por %p41, %p42
      %p44 = scmp.ne.s32.totalorder %s30, %s31
      %p45 = scmp.eq.s32.totalorder %s23, 1
      %p46 = por %p44, %p45
      %p48 = scmp.ne.s32.totalorder %s31, %s47
      %p49 = scmp.eq.s32.totalorder %s23, 0
      %p50 = por %p48, %p49
      %s52 = sadd.s32 %s51, 1
      %p55 = scmp.eq.s32.totalorder %s17, 1
      %p56 = scmp.ne.s32.totalorder %s51, %s53
      %p57 = scmp.eq.s32.totalorder %s17, 0
      %p58 = por %p56, %p57
      %p59 = scmp.ne.s32.totalorder %s51, %s53
      %p60 = scmp.eq.s32.totalorder %s22, 1
      %p61 = por %p59, %p60
      %p62 = scmp.ne.s32.totalorder %s53, %s54
      %p63 = scmp.eq.s32.totalorder %s22, 0
      %p64 = por %p62, %p63
      %p65 = scmp.ne.s32.totalorder %s53, %s54
      %p66 = scmp.eq.s32.totalorder %s23, 1
      %p67 = por %p65, %p66
      %p69 = scmp.ne.s32.totalorder %s54, %s68
      %p70 = scmp.eq.s32.totalorder %s23, 0
      %p71 = por %p69, %p70
      %s73 = sadd.s32 %s72, 1
      %p76 = scmp.eq.s32.totalorder %s17, 1
      %p77 = scmp.ne.s32.totalorder %s72, %s74
      %p78 = scmp.eq.s32.totalorder %s17, 0
      %p79 = por %p77, %p78
      %p80 = scmp.ne.s32.totalorder %s72, %s74
      %p81 = scmp.eq.s32.totalorder %s22, 1
      %p82 = por %p80, %p81
      %p83 = scmp.ne.s32.totalorder %s74, %s75
      %p84 = scmp.eq.s32.totalorder %s22, 0
      %p85 = por %p83, %p84
      %p86 = scmp.ne.s32.totalorder %s74, %s75
      %p87 = scmp.eq.s32.totalorder %s23, 1
      %p88 = por %p86, %p87
      %p90 = scmp.ne.s32.totalorder %s75, %s89
      %p91 = scmp.eq.s32.totalorder %s23, 0
      %p92 = por %p90, %p91
      %s94 = sadd.s32 %s93, 1
      %p97 = scmp.eq.s32.totalorder %s17, 1
      %p98 = scmp.ne.s32.totalorder %s93, %s95
      %p99 = scmp.eq.s32.totalorder %s17, 0
      %p100 = por %p98, %p99
      %p101 = scmp.ne.s32.totalorder %s93, %s95
      %p102 = scmp.eq.s32.totalorder %s22, 1
      %p103 = por %p101, %p102
      %p104 = scmp.ne.s32.totalorder %s95, %s96
      %p105 = scmp.eq.s32.totalorder %s22, 0
      %p106 = por %p104, %p105
      %p107 = scmp.ne.s32.totalorder %s95, %s96
      %p108 = scmp.eq.s32.totalorder %s23, 1
      %p109 = por %p107, %p108
      %p111 = scmp.ne.s32.totalorder %s96, %s110
      %p112 = scmp.eq.s32.totalorder %s23, 0
      %p113 = por %p111, %p112
      %s114 = ssub.s32 %s17, %s24
      %p115 = scmp.eq.s32.totalorder %s114, 0
      %s117 = sadd.s32 %s116, 1
      %s118 = scalar_select %p115, %s116, %s117
      %p121 = pneg %p115
      %p122 = scmp.eq.s32.totalorder %s17, 1
      %p123 = por %p121, %p122
      %p124 = scmp.ne.s32.totalorder %s116, %s119
      %p125 = scmp.eq.s32.totalorder %s17, 0
      %p126 = por %p124, %p125
      %p127 = scmp.ne.s32.totalorder %s116, %s119
      %p128 = scmp.eq.s32.totalorder %s22, 1
      %p129 = por %p127, %p128
      %p130 = scmp.ne.s32.totalorder %s119, %s120
      %p131 = scmp.eq.s32.totalorder %s22, 0
      %p132 = por %p130, %p131
      %p133 = scmp.ne.s32.totalorder %s119, %s120
      %p134 = scmp.eq.s32.totalorder %s23, 1
      %p135 = por %p133, %p134
      %p137 = scmp.ne.s32.totalorder %s120, %s136
      %p138 = scmp.eq.s32.totalorder %s23, 0
      %p139 = por %p137, %p138
      %p140 = scmp.le.s32.totalorder 1, %s17
      %p141 = scmp.lt.s32.totalorder %s17, 3
      %p142 = pnand %p140, %p141
      %p143 = pneg %p142
      // Predicated region
      $region9: #{tpu_custom_call.1} parent=5 // pred_check
        _
      $region10: #{tpu_custom_call.1} parent=5 // pred_check_branch
        %145 = sbr.rel (%p142) target = $region12
      $region11: #{tpu_custom_call.1} parent=5 // pred_region
        %s146 = ssub.s32 %s17, 1
        // Predicated region
        $region13: #{tpu_custom_call.1} parent=11 // pred_check
          %p147 = pneg %p64
        $region14: #{tpu_custom_call.1} parent=11 // pred_check_branch
          %149 = sbr.rel (%p147) target = $region16
        $region15: #{tpu_custom_call.1} parent=11 // pred_region
          %s151 = ssub.s32 256, 256
          %152 = vsyncadd [#allocation6], %s151
          %s153 = sshll.u32 [#allocation5], 4
          %s154 = int_to_ptr.vmem [resolvable:$true] %s153
          %159 = dma.hbm_to_vmem [thread:$0]  %s1, 256, %s154, [#allocation6], 64, 64, 4
        $region16: #{tpu_custom_call.1} parent=11 // pred_fallthru
          _
        // Predicated region
        $region17: #{tpu_custom_call.1} parent=11 // pred_check
          %p160 = pneg %p85
        $region18: #{tpu_custom_call.1} parent=11 // pred_check_branch
          %162 = sbr.rel (%p160) target = $region20
        $region19: #{tpu_custom_call.1} parent=11 // pred_region
          %s164 = ssub.s32 256, 256
          %165 = vsyncadd [#allocation6], %s164
          %s166 = sshll.u32 [#allocation7], 4
          %s167 = int_to_ptr.vmem [resolvable:$true] %s166
          %172 = dma.hbm_to_vmem [thread:$0]  %s2, 256, %s167, [#allocation6], 64, 64, 4
        $region20: #{tpu_custom_call.1} parent=11 // pred_fallthru
          _
        // Predicated region
        $region21: #{tpu_custom_call.1} parent=11 // pred_check
          %p173 = pneg %p106
        $region22: #{tpu_custom_call.1} parent=11 // pred_check_branch
          %175 = sbr.rel (%p173) target = $region24
        $region23: #{tpu_custom_call.1} parent=11 // pred_region
          _
        $region24: #{tpu_custom_call.1} parent=11 // pred_fallthru
          _
      $region12: #{tpu_custom_call.1} parent=5 // pred_fallthru
        _
      %p176 = scmp.lt.s32.totalorder %s17, 2
      // Predicated region
      $region25: #{tpu_custom_call.1} parent=5 // pred_check
        %p177 = pneg %p176
      $region26: #{tpu_custom_call.1} parent=5 // pred_check_branch
        %179 = sbr.rel (%p177) target = $region28
      $region27: #{tpu_custom_call.1} parent=5 // pred_region
        // Predicated region
        $region29: #{tpu_custom_call.1} parent=27 // pred_check
          %p180 = pneg %p37
        $region30: #{tpu_custom_call.1} parent=27 // pred_check_branch
          %182 = sbr.rel (%p180) target = $region32
        $region31: #{tpu_custom_call.1} parent=27 // pred_region
          %s183 = sand.u32 %s27, 1
          %s184 = scalar_lea.sflag [#allocation3], %s183
          %s185 = sand.u32 %s27, 1
          %s186 = smul.addr %s185, 8
          %s187 = scalar_lea.vmem [#allocation2], %s186
          %s189 = ssub.s32 128, 128
          %190 = vsyncadd %s184, %s189
          %s191 = smul.addr %s17, 128
          %s192 = scalar_lea.hbm %s0, %s191
          %s194 = sshll.u32 %s187, 4
          %s195 = int_to_ptr.vmem [resolvable:$true] %s194
          %197 = dma.hbm_to_vmem [thread:$0]  %s192, 128, %s195, %s184
        $region32: #{tpu_custom_call.1} parent=27 // pred_fallthru
          _
      $region28: #{tpu_custom_call.1} parent=5 // pred_fallthru
        _
      %p198 = scmp.le.s32.totalorder 1, %s17
      %p199 = scmp.lt.s32.totalorder %s17, 3
      %p200 = pnand %p198, %p199
      %p201 = pneg %p200
      // Predicated region
      $region33: #{tpu_custom_call.1} parent=5 // pred_check
        _
      $region34: #{tpu_custom_call.1} parent=5 // pred_check_branch
        %203 = sbr.rel (%p200) target = $region36
      $region35: #{tpu_custom_call.1} parent=5 // pred_region
        %s204 = ssub.s32 %s17, 1
        %s205 = sand.u32 %s30, 1
        %s206 = scalar_lea.sflag [#allocation3], %s205
        %s207 = sand.u32 %s30, 1
        %s208 = smul.addr %s207, 8
        %s209 = scalar_lea.vmem [#allocation2], %s208
        // Predicated region
        $region37: #{tpu_custom_call.1} parent=35 // pred_check
          %p210 = pneg %p43
        $region38: #{tpu_custom_call.1} parent=35 // pred_check_branch
          %212 = sbr.rel (%p210) target = $region40
        $region39: #{tpu_custom_call.1} parent=35 // pred_region
          %213 = dma.done %s206, 128
        $region40: #{tpu_custom_call.1} parent=35 // pred_fallthru
          _
        // Predicated region
        $region41: #{tpu_custom_call.1} parent=35 // pred_check
          %p214 = pneg %p64
        $region42: #{tpu_custom_call.1} parent=35 // pred_check_branch
          %216 = sbr.rel (%p214) target = $region44
        $region43: #{tpu_custom_call.1} parent=35 // pred_region
          %217 = dma.done [#allocation6], 256
        $region44: #{tpu_custom_call.1} parent=35 // pred_fallthru
          _
        // Predicated region
        $region45: #{tpu_custom_call.1} parent=35 // pred_check
          %p218 = pneg %p85
        $region46: #{tpu_custom_call.1} parent=35 // pred_check_branch
          %220 = sbr.rel (%p218) target = $region48
        $region47: #{tpu_custom_call.1} parent=35 // pred_region
          %221 = dma.done [#allocation6], 256
        $region48: #{tpu_custom_call.1} parent=35 // pred_fallthru
          _
        %s222 = sand.u32 %s30, 1
        %s223 = scalar_lea.sflag [#allocation3], %s222
        %s224 = sand.u32 %s30, 1
        %s225 = smul.addr %s224, 8
        %s226 = scalar_lea.vmem [#allocation2], %s225
        %p227 = pneg %p43
        %p228 = pneg %p40
        %p229 = pneg %p64
        %p230 = pneg %p61
        %p231 = pneg %p85
        %p232 = pneg %p82
        %p233 = pneg %p106
        %p234 = pneg %p103
        %p235 = pneg %p132
        %p236 = pneg %p129
        %s237 = sand.u32 %s119, 1
        %s238 = scalar_lea.sflag [#allocation4], %s237
        %s239 = sand.u32 %s119, 1
        %s240 = smul.addr %s239, 8
        %s241 = scalar_lea.vmem [#allocation8], %s240
        %v243 = vld [vmem:[%s209] sm:$0xff]
        %v244 = vpack.c.bf16 %v243, %v243
        %v245 = vld [vmem:[#allocation5] sm:$0xf]
        %v246 = vld [vmem:[#allocation5 + $0x4] sm:$0xf]
        %v247 = vld [vmem:[#allocation5 + $0x8] sm:$0xf]
        %v248 = vld [vmem:[#allocation5 + $0xc] sm:$0xf]
        %v253 = vunpack.c.l.b16 %v245
        %v254 = vunpack.c.l.b16 %v246
        %v255 = vunpack.c.l.b16 %v247
        %v256 = vunpack.c.l.b16 %v248
        %v257 = vpack.c.b16 %v254, %v253
        %v258 = vpack.c.b16 %v256, %v255
        %vm261 = vcmask 261120
        %v263 = vsel %vm261, %v244, 0
        %265 = vmatprep.subr.bf16.mxu0 0
        %266 = vmatpush1.bf16.msra.mxu0 0
        %267 = vmatprep.subr.bf16.mxu0 0
        %268 = vmatpush1.bf16.msra.mxu0 0
        %269 = vmatprep.subr.bf16.mxu0 0
        %270 = vmatpush1.bf16.msra.mxu0 0
        %271 = vmatprep.subr.bf16.mxu0 0
        %272 = vmatpush1.bf16.msra.mxu0 0
        %273 = vmatprep.subr.bf16.mxu0 0
        %274 = vmatpush1.bf16.msra.mxu0 0
        %275 = vmatprep.subr.bf16.mxu0 0
        %276 = vmatpush1.bf16.msra.mxu0 0
        %277 = vmatprep.subr.bf16.mxu0 0
        %278 = vmatpush1.bf16.msra.mxu0 %v258
        %279 = vmatprep.subr.bf16.mxu0 0
        %280 = vmatpush1.bf16.msra.mxu0 %v257
        %281 = vmatprep.subr.bf16.mxu0 0
        %282 = vmatpush2.bf16.msra.mxu0 0
        %283 = vmatprep.subr.bf16.mxu0 0
        %284 = vmatpush2.bf16.msra.mxu0 0
        %285 = vmatprep.subr.bf16.mxu0 0
        %286 = vmatpush2.bf16.msra.mxu0 0
        %287 = vmatprep.subr.bf16.mxu0 0
        %288 = vmatpush2.bf16.msra.mxu0 0
        %289 = vmatprep.subr.bf16.mxu0 0
        %290 = vmatpush2.bf16.msra.mxu0 0
        %291 = vmatprep.subr.bf16.mxu0 0
        %292 = vmatpush2.bf16.msra.mxu0 0
        %293 = vmatprep.subr.bf16.mxu0 0
        %294 = vmatpush2.bf16.msra.mxu0 0
        %295 = vmatprep.subr.bf16.mxu0 0
        %296 = vmatpush2.bf16.msra.mxu0 0
        %297 = vmatprep.mubr.bf16.mxu0 0
        %298 = vmatmul.mubr.bf16.gmra.mxu0 %v263
        %v299 = vpop.f32.mrf.mxu0
        %v300 = vadd.f32 0.0, %v299
        %v301 = vpop.f32.mrf.mxu0
        %v302 = vpop.f32.mrf.mxu0
        %v303 = vpop.f32.mrf.mxu0
        %304 = vdwg.mxu0
        %v305 = vpack.c.bf16 %v300, %v300
        %307 = vrot.lane.b32.xlu0 %v305, 120
        %v308 = vpop.permute.xlu0 %307
        %309 = vrot.lane.b32.xlu0 %v305, 112
        %v310 = vpop.permute.xlu0 %309
        %311 = vrot.lane.b32.xlu0 %v305, 104
        %v312 = vpop.permute.xlu0 %311
        %313 = vrot.lane.b32.xlu0 %v305, 96
        %v314 = vpop.permute.xlu0 %313
        %vm315 = vcmask 64512
        %v317 = vsel %vm315, %v305, 0
        %v320 = vsel %vm315, %v314, 0
        %322 = vmatprep.subr.bf16.mxu0 0
        %323 = vmatpush1.bf16.xpose.msra.mxu0 0
        %324 = vmatprep.subr.bf16.mxu0 0
        %325 = vmatpush1.bf16.xpose.msra.mxu0 0
        %326 = vmatprep.subr.bf16.mxu0 0
        %327 = vmatpush1.bf16.xpose.msra.mxu0 0
        %328 = vmatprep.subr.bf16.mxu0 0
        %329 = vmatpush1.bf16.xpose.msra.mxu0 0
        %330 = vmatprep.subr.bf16.mxu0 0
        %331 = vmatpush1.bf16.xpose.msra.mxu0 0
        %332 = vmatprep.subr.bf16.mxu0 0
        %333 = vmatpush1.bf16.xpose.msra.mxu0 0
        %334 = vmatprep.subr.bf16.mxu0 0
        %335 = vmatpush1.bf16.xpose.msra.mxu0 0
        %336 = vmatprep.subr.bf16.mxu0 0
        %337 = vmatpush1.bf16.xpose.msra.mxu0 %v320
        %338 = vmatprep.subr.bf16.mxu0 0
        %339 = vmatpush2.bf16.xpose.msra.mxu0 0
        %340 = vmatprep.subr.bf16.mxu0 0
        %341 = vmatpush2.bf16.xpose.msra.mxu0 0
        %342 = vmatprep.subr.bf16.mxu0 0
        %343 = vmatpush2.bf16.xpose.msra.mxu0 0
        %344 = vmatprep.subr.bf16.mxu0 0
        %345 = vmatpush2.bf16.xpose.msra.mxu0 0
        %346 = vmatprep.subr.bf16.mxu0 0
        %347 = vmatpush2.bf16.xpose.msra.mxu0 0
        %348 = vmatprep.subr.bf16.mxu0 0
        %349 = vmatpush2.bf16.xpose.msra.mxu0 0
        %350 = vmatprep.subr.bf16.mxu0 0
        %351 = vmatpush2.bf16.xpose.msra.mxu0 0
        %352 = vmatprep.subr.bf16.mxu0 0
        %353 = vmatpush2.bf16.xpose.msra.mxu0 0
        %354 = vmatprep.mubr.bf16.mxu0 0
        %355 = vmatmul.mubr.bf16.gmra.mxu0 %v317
        %v356 = vpop.f32.mrf.mxu0
        %v357 = vadd.f32 0.0, %v356
        %v358 = vpop.f32.mrf.mxu0
        %v359 = vpop.f32.mrf.mxu0
        %v360 = vpop.f32.mrf.mxu0
        %361 = vdwg.mxu0
        %362 = vrot.lane.b32.xlu0 %v308, 96
        %v363 = vpop.permute.xlu0 %362
        %v365 = vsel %vm315, %v308, 0
        %v368 = vsel %vm315, %v363, 0
        %370 = vmatprep.subr.bf16.mxu0 0
        %371 = vmatpush1.bf16.xpose.msra.mxu0 0
        %372 = vmatprep.subr.bf16.mxu0 0
        %373 = vmatpush1.bf16.xpose.msra.mxu0 0
        %374 = vmatprep.subr.bf16.mxu0 0
        %375 = vmatpush1.bf16.xpose.msra.mxu0 0
        %376 = vmatprep.subr.bf16.mxu0 0
        %377 = vmatpush1.bf16.xpose.msra.mxu0 0
        %378 = vmatprep.subr.bf16.mxu0 0
        %379 = vmatpush1.bf16.xpose.msra.mxu0 0
        %380 = vmatprep.subr.bf16.mxu0 0
        %381 = vmatpush1.bf16.xpose.msra.mxu0 0
        %382 = vmatprep.subr.bf16.mxu0 0
        %383 = vmatpush1.bf16.xpose.msra.mxu0 0
        %384 = vmatprep.subr.bf16.mxu0 0
        %385 = vmatpush1.bf16.xpose.msra.mxu0 %v368
        %386 = vmatprep.subr.bf16.mxu0 0
        %387 = vmatpush2.bf16.xpose.msra.mxu0 0
        %388 = vmatprep.subr.bf16.mxu0 0
        %389 = vmatpush2.bf16.xpose.msra.mxu0 0
        %390 = vmatprep.subr.bf16.mxu0 0
        %391 = vmatpush2.bf16.xpose.msra.mxu0 0
        %392 = vmatprep.subr.bf16.mxu0 0
        %393 = vmatpush2.bf16.xpose.msra.mxu0 0
        %394 = vmatprep.subr.bf16.mxu0 0
        %395 = vmatpush2.bf16.xpose.msra.mxu0 0
        %396 = vmatprep.subr.bf16.mxu0 0
        %397 = vmatpush2.bf16.xpose.msra.mxu0 0
        %398 = vmatprep.subr.bf16.mxu0 0
        %399 = vmatpush2.bf16.xpose.msra.mxu0 0
        %400 = vmatprep.subr.bf16.mxu0 0
        %401 = vmatpush2.bf16.xpose.msra.mxu0 0
        %402 = vmatprep.mubr.bf16.mxu0 0
        %403 = vmatmul.mubr.bf16.gmra.mxu0 %v365
        %v404 = vpop.f32.mrf.mxu0
        %v405 = vadd.f32 0.0, %v404
        %v406 = vpop.f32.mrf.mxu0
        %v407 = vpop.f32.mrf.mxu0
        %v408 = vpop.f32.mrf.mxu0
        %409 = vdwg.mxu0
        %410 = vrot.lane.b32.xlu0 %v310, 96
        %v411 = vpop.permute.xlu0 %410
        %v413 = vsel %vm315, %v310, 0
        %v416 = vsel %vm315, %v411, 0
        %418 = vmatprep.subr.bf16.mxu0 0
        %419 = vmatpush1.bf16.xpose.msra.mxu0 0
        %420 = vmatprep.subr.bf16.mxu0 0
        %421 = vmatpush1.bf16.xpose.msra.mxu0 0
        %422 = vmatprep.subr.bf16.mxu0 0
        %423 = vmatpush1.bf16.xpose.msra.mxu0 0
        %424 = vmatprep.subr.bf16.mxu0 0
        %425 = vmatpush1.bf16.xpose.msra.mxu0 0
        %426 = vmatprep.subr.bf16.mxu0 0
        %427 = vmatpush1.bf16.xpose.msra.mxu0 0
        %428 = vmatprep.subr.bf16.mxu0 0
        %429 = vmatpush1.bf16.xpose.msra.mxu0 0
        %430 = vmatprep.subr.bf16.mxu0 0
        %431 = vmatpush1.bf16.xpose.msra.mxu0 0
        %432 = vmatprep.subr.bf16.mxu0 0
        %433 = vmatpush1.bf16.xpose.msra.mxu0 %v416
        %434 = vmatprep.subr.bf16.mxu0 0
        %435 = vmatpush2.bf16.xpose.msra.mxu0 0
        %436 = vmatprep.subr.bf16.mxu0 0
        %437 = vmatpush2.bf16.xpose.msra.mxu0 0
        %438 = vmatprep.subr.bf16.mxu0 0
        %439 = vmatpush2.bf16.xpose.msra.mxu0 0
        %440 = vmatprep.subr.bf16.mxu0 0
        %441 = vmatpush2.bf16.xpose.msra.mxu0 0
        %442 = vmatprep.subr.bf16.mxu0 0
        %443 = vmatpush2.bf16.xpose.msra.mxu0 0
        %444 = vmatprep.subr.bf16.mxu0 0
        %445 = vmatpush2.bf16.xpose.msra.mxu0 0
        %446 = vmatprep.subr.bf16.mxu0 0
        %447 = vmatpush2.bf16.xpose.msra.mxu0 0
        %448 = vmatprep.subr.bf16.mxu0 0
        %449 = vmatpush2.bf16.xpose.msra.mxu0 0
        %450 = vmatprep.mubr.bf16.mxu0 0
        %451 = vmatmul.mubr.bf16.gmra.mxu0 %v413
        %v452 = vpop.f32.mrf.mxu0
        %v453 = vadd.f32 0.0, %v452
        %v454 = vpop.f32.mrf.mxu0
        %v455 = vpop.f32.mrf.mxu0
        %v456 = vpop.f32.mrf.mxu0
        %457 = vdwg.mxu0
        %458 = vrot.lane.b32.xlu0 %v312, 96
        %v459 = vpop.permute.xlu0 %458
        %v461 = vsel %vm315, %v312, 0
        %v464 = vsel %vm315, %v459, 0
        %466 = vmatprep.subr.bf16.mxu0 0
        %467 = vmatpush1.bf16.xpose.msra.mxu0 0
        %468 = vmatprep.subr.bf16.mxu0 0
        %469 = vmatpush1.bf16.xpose.msra.mxu0 0
        %470 = vmatprep.subr.bf16.mxu0 0
        %471 = vmatpush1.bf16.xpose.msra.mxu0 0
        %472 = vmatprep.subr.bf16.mxu0 0
        %473 = vmatpush1.bf16.xpose.msra.mxu0 0
        %474 = vmatprep.subr.bf16.mxu0 0
        %475 = vmatpush1.bf16.xpose.msra.mxu0 0
        %476 = vmatprep.subr.bf16.mxu0 0
        %477 = vmatpush1.bf16.xpose.msra.mxu0 0
        %478 = vmatprep.subr.bf16.mxu0 0
        %479 = vmatpush1.bf16.xpose.msra.mxu0 0
        %480 = vmatprep.subr.bf16.mxu0 0
        %481 = vmatpush1.bf16.xpose.msra.mxu0 %v464
        %482 = vmatprep.subr.bf16.mxu0 0
        %483 = vmatpush2.bf16.xpose.msra.mxu0 0
        %484 = vmatprep.subr.bf16.mxu0 0
        %485 = vmatpush2.bf16.xpose.msra.mxu0 0
        %486 = vmatprep.subr.bf16.mxu0 0
        %487 = vmatpush2.bf16.xpose.msra.mxu0 0
        %488 = vmatprep.subr.bf16.mxu0 0
        %489 = vmatpush2.bf16.xpose.msra.mxu0 0
        %490 = vmatprep.subr.bf16.mxu0 0
        %491 = vmatpush2.bf16.xpose.msra.mxu0 0
        %492 = vmatprep.subr.bf16.mxu0 0
        %493 = vmatpush2.bf16.xpose.msra.mxu0 0
        %494 = vmatprep.subr.bf16.mxu0 0
        %495 = vmatpush2.bf16.xpose.msra.mxu0 0
        %496 = vmatprep.subr.bf16.mxu0 0
        %497 = vmatpush2.bf16.xpose.msra.mxu0 0
        %498 = vmatprep.mubr.bf16.mxu0 0
        %499 = vmatmul.mubr.bf16.gmra.mxu0 %v461
        %v500 = vpop.f32.mrf.mxu0
        %v501 = vadd.f32 0.0, %v500
        %v502 = vpop.f32.mrf.mxu0
        %v503 = vpop.f32.mrf.mxu0
        %v504 = vpop.f32.mrf.mxu0
        %505 = vdwg.mxu0
        %v506 = vsel %vm315, %v357, -inf
        %507 = vmax.xlane.f32.xlu0 %v506
        %v508 = vpop.xlane.xlu0 %507
        %v509 = vsel %vm315, %v405, -inf
        %510 = vmax.xlane.f32.xlu0 %v509
        %v511 = vpop.xlane.xlu0 %510
        %v512 = vsel %vm315, %v453, -inf
        %513 = vmax.xlane.f32.xlu0 %v512
        %v514 = vpop.xlane.xlu0 %513
        %v515 = vsel %vm315, %v501, -inf
        %516 = vmax.xlane.f32.xlu0 %v515
        %v517 = vpop.xlane.xlu0 %516
        %v518 = vsub.f32 %v357, %v508
        %v519 = vsub.f32 %v405, %v511
        %v520 = vsub.f32 %v453, %v514
        %v521 = vsub.f32 %v501, %v517
        %v522 = vmul.f32 %v518, 1.442695
        %v523 = vpow.pop %v522
        %v524 = vmul.f32 %v519, 1.442695
        %v525 = vpow.pop %v524
        %v526 = vmul.f32 %v520, 1.442695
        %v527 = vpow.pop %v526
        %v528 = vmul.f32 %v521, 1.442695
        %v529 = vpow.pop %v528
        %v530 = vsel %vm315, %v523, 0.0
        %531 = vadd.xlane.f32.xlu0 %v530
        %v532 = vpop.xlane.xlu0 %531
        %v533 = vsel %vm315, %v525, 0.0
        %534 = vadd.xlane.f32.xlu0 %v533
        %v535 = vpop.xlane.xlu0 %534
        %v536 = vsel %vm315, %v527, 0.0
        %537 = vadd.xlane.f32.xlu0 %v536
        %v538 = vpop.xlane.xlu0 %537
        %v539 = vsel %vm315, %v529, 0.0
        %540 = vadd.xlane.f32.xlu0 %v539
        %v541 = vpop.xlane.xlu0 %540
        %v542 = vrcp.pop %v532
        %v543 = vrcp.pop %v535
        %v544 = vrcp.pop %v538
        %v545 = vrcp.pop %v541
        %v546 = vmul.f32 %v523, %v542
        %v547 = vmul.f32 %v525, %v543
        %v548 = vmul.f32 %v527, %v544
        %v549 = vmul.f32 %v529, %v545
        %v550 = vpack.c.bf16 %v546, %v546
        %v551 = vpack.c.bf16 %v547, %v547
        %v552 = vpack.c.bf16 %v548, %v548
        %v553 = vpack.c.bf16 %v549, %v549
        %554 = vrot.lane.b32.xlu0 %v305, 64
        %v555 = vpop.permute.xlu0 %554
        %v557 = vsel %vm315, %v550, 0
        %vm559 = vcmask 1043456
        %v561 = vsel %vm559, %v555, 0
        %563 = vmatprep.subr.bf16.mxu0 0
        %564 = vmatpush1.bf16.msra.mxu0 0
        %565 = vmatprep.subr.bf16.mxu0 0
        %566 = vmatpush1.bf16.msra.mxu0 0
        %567 = vmatprep.subr.bf16.mxu0 0
        %568 = vmatpush1.bf16.msra.mxu0 0
        %569 = vmatprep.subr.bf16.mxu0 0
        %570 = vmatpush1.bf16.msra.mxu0 0
        %571 = vmatprep.subr.bf16.mxu0 0
        %572 = vmatpush1.bf16.msra.mxu0 0
        %573 = vmatprep.subr.bf16.mxu0 0
        %574 = vmatpush1.bf16.msra.mxu0 0
        %575 = vmatprep.subr.bf16.mxu0 0
        %576 = vmatpush1.bf16.msra.mxu0 0
        %577 = vmatprep.subr.bf16.mxu0 0
        %578 = vmatpush1.bf16.msra.mxu0 %v561
        %579 = vmatprep.subr.bf16.mxu0 0
        %580 = vmatpush2.bf16.msra.mxu0 0
        %581 = vmatprep.subr.bf16.mxu0 0
        %582 = vmatpush2.bf16.msra.mxu0 0
        %583 = vmatprep.subr.bf16.mxu0 0
        %584 = vmatpush2.bf16.msra.mxu0 0
        %585 = vmatprep.subr.bf16.mxu0 0
        %586 = vmatpush2.bf16.msra.mxu0 0
        %587 = vmatprep.subr.bf16.mxu0 0
        %588 = vmatpush2.bf16.msra.mxu0 0
        %589 = vmatprep.subr.bf16.mxu0 0
        %590 = vmatpush2.bf16.msra.mxu0 0
        %591 = vmatprep.subr.bf16.mxu0 0
        %592 = vmatpush2.bf16.msra.mxu0 0
        %593 = vmatprep.subr.bf16.mxu0 0
        %594 = vmatpush2.bf16.msra.mxu0 0
        %595 = vmatprep.mubr.bf16.mxu0 0
        %596 = vmatmul.mubr.bf16.gmra.mxu0 %v557
        %v597 = vpop.f32.mrf.mxu0
        %v598 = vadd.f32 0.0, %v597
        %v599 = vpop.f32.mrf.mxu0
        %v600 = vpop.f32.mrf.mxu0
        %v601 = vpop.f32.mrf.mxu0
        %602 = vdwg.mxu0
        %603 = vrot.lane.b32.xlu0 %v308, 64
        %v604 = vpop.permute.xlu0 %603
        %v606 = vsel %vm315, %v551, 0
        %v609 = vsel %vm559, %v604, 0
        %611 = vmatprep.subr.bf16.mxu0 0
        %612 = vmatpush1.bf16.msra.mxu0 0
        %613 = vmatprep.subr.bf16.mxu0 0
        %614 = vmatpush1.bf16.msra.mxu0 0
        %615 = vmatprep.subr.bf16.mxu0 0
        %616 = vmatpush1.bf16.msra.mxu0 0
        %617 = vmatprep.subr.bf16.mxu0 0
        %618 = vmatpush1.bf16.msra.mxu0 0
        %619 = vmatprep.subr.bf16.mxu0 0
        %620 = vmatpush1.bf16.msra.mxu0 0
        %621 = vmatprep.subr.bf16.mxu0 0
        %622 = vmatpush1.bf16.msra.mxu0 0
        %623 = vmatprep.subr.bf16.mxu0 0
        %624 = vmatpush1.bf16.msra.mxu0 0
        %625 = vmatprep.subr.bf16.mxu0 0
        %626 = vmatpush1.bf16.msra.mxu0 %v609
        %627 = vmatprep.subr.bf16.mxu0 0
        %628 = vmatpush2.bf16.msra.mxu0 0
        %629 = vmatprep.subr.bf16.mxu0 0
        %630 = vmatpush2.bf16.msra.mxu0 0
        %631 = vmatprep.subr.bf16.mxu0 0
        %632 = vmatpush2.bf16.msra.mxu0 0
        %633 = vmatprep.subr.bf16.mxu0 0
        %634 = vmatpush2.bf16.msra.mxu0 0
        %635 = vmatprep.subr.bf16.mxu0 0
        %636 = vmatpush2.bf16.msra.mxu0 0
        %637 = vmatprep.subr.bf16.mxu0 0
        %638 = vmatpush2.bf16.msra.mxu0 0
        %639 = vmatprep.subr.bf16.mxu0 0
        %640 = vmatpush2.bf16.msra.mxu0 0
        %641 = vmatprep.subr.bf16.mxu0 0
        %642 = vmatpush2.bf16.msra.mxu0 0
        %643 = vmatprep.mubr.bf16.mxu0 0
        %644 = vmatmul.mubr.bf16.gmra.mxu0 %v606
        %v645 = vpop.f32.mrf.mxu0
        %v646 = vadd.f32 0.0, %v645
        %v647 = vpop.f32.mrf.mxu0
        %v648 = vpop.f32.mrf.mxu0
        %v649 = vpop.f32.mrf.mxu0
        %650 = vdwg.mxu0
        %651 = vrot.lane.b32.xlu0 %v310, 64
        %v652 = vpop.permute.xlu0 %651
        %v654 = vsel %vm315, %v552, 0
        %v657 = vsel %vm559, %v652, 0
        %659 = vmatprep.subr.bf16.mxu0 0
        %660 = vmatpush1.bf16.msra.mxu0 0
        %661 = vmatprep.subr.bf16.mxu0 0
        %662 = vmatpush1.bf16.msra.mxu0 0
        %663 = vmatprep.subr.bf16.mxu0 0
        %664 = vmatpush1.bf16.msra.mxu0 0
        %665 = vmatprep.subr.bf16.mxu0 0
        %666 = vmatpush1.bf16.msra.mxu0 0
        %667 = vmatprep.subr.bf16.mxu0 0
        %668 = vmatpush1.bf16.msra.mxu0 0
        %669 = vmatprep.subr.bf16.mxu0 0
        %670 = vmatpush1.bf16.msra.mxu0 0
        %671 = vmatprep.subr.bf16.mxu0 0
        %672 = vmatpush1.bf16.msra.mxu0 0
        %673 = vmatprep.subr.bf16.mxu0 0
        %674 = vmatpush1.bf16.msra.mxu0 %v657
        %675 = vmatprep.subr.bf16.mxu0 0
        %676 = vmatpush2.bf16.msra.mxu0 0
        %677 = vmatprep.subr.bf16.mxu0 0
        %678 = vmatpush2.bf16.msra.mxu0 0
        %679 = vmatprep.subr.bf16.mxu0 0
        %680 = vmatpush2.bf16.msra.mxu0 0
        %681 = vmatprep.subr.bf16.mxu0 0
        %682 = vmatpush2.bf16.msra.mxu0 0
        %683 = vmatprep.subr.bf16.mxu0 0
        %684 = vmatpush2.bf16.msra.mxu0 0
        %685 = vmatprep.subr.bf16.mxu0 0
        %686 = vmatpush2.bf16.msra.mxu0 0
        %687 = vmatprep.subr.bf16.mxu0 0
        %688 = vmatpush2.bf16.msra.mxu0 0
        %689 = vmatprep.subr.bf16.mxu0 0
        %690 = vmatpush2.bf16.msra.mxu0 0
        %691 = vmatprep.mubr.bf16.mxu0 0
        %692 = vmatmul.mubr.bf16.gmra.mxu0 %v654
        %v693 = vpop.f32.mrf.mxu0
        %v694 = vadd.f32 0.0, %v693
        %v695 = vpop.f32.mrf.mxu0
        %v696 = vpop.f32.mrf.mxu0
        %v697 = vpop.f32.mrf.mxu0
        %698 = vdwg.mxu0
        %699 = vrot.lane.b32.xlu0 %v312, 64
        %v700 = vpop.permute.xlu0 %699
        %v702 = vsel %vm315, %v553, 0
        %v705 = vsel %vm559, %v700, 0
        %707 = vmatprep.subr.bf16.mxu0 0
        %708 = vmatpush1.bf16.msra.mxu0 0
        %709 = vmatprep.subr.bf16.mxu0 0
        %710 = vmatpush1.bf16.msra.mxu0 0
        %711 = vmatprep.subr.bf16.mxu0 0
        %712 = vmatpush1.bf16.msra.mxu0 0
        %713 = vmatprep.subr.bf16.mxu0 0
        %714 = vmatpush1.bf16.msra.mxu0 0
        %715 = vmatprep.subr.bf16.mxu0 0
        %716 = vmatpush1.bf16.msra.mxu0 0
        %717 = vmatprep.subr.bf16.mxu0 0
        %718 = vmatpush1.bf16.msra.mxu0 0
        %719 = vmatprep.subr.bf16.mxu0 0
        %720 = vmatpush1.bf16.msra.mxu0 0
        %721 = vmatprep.subr.bf16.mxu0 0
        %722 = vmatpush1.bf16.msra.mxu0 %v705
        %723 = vmatprep.subr.bf16.mxu0 0
        %724 = vmatpush2.bf16.msra.mxu0 0
        %725 = vmatprep.subr.bf16.mxu0 0
        %726 = vmatpush2.bf16.msra.mxu0 0
        %727 = vmatprep.subr.bf16.mxu0 0
        %728 = vmatpush2.bf16.msra.mxu0 0
        %729 = vmatprep.subr.bf16.mxu0 0
        %730 = vmatpush2.bf16.msra.mxu0 0
        %731 = vmatprep.subr.bf16.mxu0 0
        %732 = vmatpush2.bf16.msra.mxu0 0
        %733 = vmatprep.subr.bf16.mxu0 0
        %734 = vmatpush2.bf16.msra.mxu0 0
        %735 = vmatprep.subr.bf16.mxu0 0
        %736 = vmatpush2.bf16.msra.mxu0 0
        %737 = vmatprep.subr.bf16.mxu0 0
        %738 = vmatpush2.bf16.msra.mxu0 0
        %739 = vmatprep.mubr.bf16.mxu0 0
        %740 = vmatmul.mubr.bf16.gmra.mxu0 %v702
        %v741 = vpop.f32.mrf.mxu0
        %v742 = vadd.f32 0.0, %v741
        %v743 = vpop.f32.mrf.mxu0
        %v744 = vpop.f32.mrf.mxu0
        %v745 = vpop.f32.mrf.mxu0
        %746 = vdwg.mxu0
        %v747 = vpack.c.bf16 %v598, %v598
        %v748 = vpack.c.bf16 %v646, %v646
        %v749 = vpack.c.bf16 %v694, %v694
        %v750 = vpack.c.bf16 %v742, %v742
        %752 = vrot.lane.b32.xlu0 %v748, 8
        %v753 = vpop.permute.xlu0 %752
        %755 = vrot.lane.b32.xlu0 %v749, 16
        %v756 = vpop.permute.xlu0 %755
        %758 = vrot.lane.b32.xlu0 %v750, 24
        %v759 = vpop.permute.xlu0 %758
        %v762 = vsel %vm315, %v747, %v753
        %vm763 = vcmask 130048
        %v765 = vsel %vm763, %v762, %v756
        %vm766 = vcmask 195584
        %v768 = vsel %vm766, %v765, %v759
        %v769 = vld [vmem:[#allocation7] sm:$0xf]
        %v770 = vld [vmem:[#allocation7 + $0x4] sm:$0xf]
        %v771 = vld [vmem:[#allocation7 + $0x8] sm:$0xf]
        %v772 = vld [vmem:[#allocation7 + $0xc] sm:$0xf]
        %v773 = vld [vmem:[%s3] sm:$0x1]
        %v775 = vlaneseq
        %v776 = vshrl.u32 %v775, 7
        %v777 = vsub.s32 0, %v776
        %v778 = vrot.slane %v773, %v777
        %v784 = vunpack.c.l.b16 %v769
        %v785 = vunpack.c.l.b16 %v770
        %v786 = vunpack.c.l.b16 %v771
        %v787 = vunpack.c.l.b16 %v772
        %v788 = vpack.c.b16 %v785, %v784
        %v789 = vpack.c.b16 %v787, %v786
        %v792 = vsel %vm261, %v768, 0
        %794 = vmatprep.subr.bf16.mxu0 0
        %795 = vmatpush1.bf16.msra.mxu0 0
        %796 = vmatprep.subr.bf16.mxu0 0
        %797 = vmatpush1.bf16.msra.mxu0 0
        %798 = vmatprep.subr.bf16.mxu0 0
        %799 = vmatpush1.bf16.msra.mxu0 0
        %800 = vmatprep.subr.bf16.mxu0 0
        %801 = vmatpush1.bf16.msra.mxu0 0
        %802 = vmatprep.subr.bf16.mxu0 0
        %803 = vmatpush1.bf16.msra.mxu0 0
        %804 = vmatprep.subr.bf16.mxu0 0
        %805 = vmatpush1.bf16.msra.mxu0 0
        %806 = vmatprep.subr.bf16.mxu0 0
        %807 = vmatpush1.bf16.msra.mxu0 %v789
        %808 = vmatprep.subr.bf16.mxu0 0
        %809 = vmatpush1.bf16.msra.mxu0 %v788
        %810 = vmatprep.subr.bf16.mxu0 0
        %811 = vmatpush2.bf16.msra.mxu0 0
        %812 = vmatprep.subr.bf16.mxu0 0
        %813 = vmatpush2.bf16.msra.mxu0 0
        %814 = vmatprep.subr.bf16.mxu0 0
        %815 = vmatpush2.bf16.msra.mxu0 0
        %816 = vmatprep.subr.bf16.mxu0 0
        %817 = vmatpush2.bf16.msra.mxu0 0
        %818 = vmatprep.subr.bf16.mxu0 0
        %819 = vmatpush2.bf16.msra.mxu0 0
        %820 = vmatprep.subr.bf16.mxu0 0
        %821 = vmatpush2.bf16.msra.mxu0 0
        %822 = vmatprep.subr.bf16.mxu0 0
        %823 = vmatpush2.bf16.msra.mxu0 0
        %824 = vmatprep.subr.bf16.mxu0 0
        %825 = vmatpush2.bf16.msra.mxu0 0
        %826 = vmatprep.mubr.bf16.mxu0 0
        %827 = vmatmul.mubr.bf16.gmra.mxu0 %v792
        %v828 = vpop.f32.mrf.mxu0
        %v829 = vadd.f32 %v778, %v828
        %v830 = vpop.f32.mrf.mxu0
        %v831 = vpop.f32.mrf.mxu0
        %v832 = vpop.f32.mrf.mxu0
        %833 = vdwg.mxu0
        %834 = vst.msk [vmem:[%s241] sm:$0xff] %vm261, %v829
        %s835 = sand.u32 %s119, 1
        %s836 = scalar_lea.sflag [#allocation4], %s835
        %s837 = sand.u32 %s119, 1
        %s838 = smul.addr %s837, 8
        %s839 = scalar_lea.vmem [#allocation8], %s838
        // Predicated region
        $region49: #{tpu_custom_call.1} parent=35 // pred_check
          %p840 = pneg %p129
        $region50: #{tpu_custom_call.1} parent=35 // pred_check_branch
          %842 = sbr.rel (%p840) target = $region52
        $region51: #{tpu_custom_call.1} parent=35 // pred_region
          %s844 = ssub.s32 128, 128
          %845 = vsyncadd %s836, %s844
          %s846 = smul.addr %s22, 128
          %s847 = scalar_lea.hbm %s4, %s846
          %s849 = sshll.u32 %s839, 4
          %s850 = int_to_ptr.vmem [resolvable:$true] %s849
          %852 = dma.vmem_to_hbm [thread:$0]  %s850, 128, %s847, %s836
        $region52: #{tpu_custom_call.1} parent=35 // pred_fallthru
          _
      $region36: #{tpu_custom_call.1} parent=5 // pred_fallthru
        _
      %p853 = scmp.le.s32.totalorder 2, %s17
      // Predicated region
      $region53: #{tpu_custom_call.1} parent=5 // pred_check
        %p854 = pneg %p853
      $region54: #{tpu_custom_call.1} parent=5 // pred_check_branch
        %856 = sbr.rel (%p854) target = $region56
      $region55: #{tpu_custom_call.1} parent=5 // pred_region
        %s857 = ssub.s32 %s17, 2
        // Predicated region
        $region57: #{tpu_custom_call.1} parent=55 // pred_check
          %p858 = pneg %p135
        $region58: #{tpu_custom_call.1} parent=55 // pred_check_branch
          %860 = sbr.rel (%p858) target = $region60
        $region59: #{tpu_custom_call.1} parent=55 // pred_region
          %s861 = sand.u32 %s120, 1
          %s862 = scalar_lea.sflag [#allocation4], %s861
          %s863 = sand.u32 %s120, 1
          %s864 = smul.addr %s863, 8
          %s865 = scalar_lea.vmem [#allocation8], %s864
          %866 = dma.done %s862, 128
        $region60: #{tpu_custom_call.1} parent=55 // pred_fallthru
          _
      $region56: #{tpu_custom_call.1} parent=5 // pred_fallthru
        _
    $region6: #{tpu_custom_call.1} parent=1 // loop_footer
      %s21 = sadd.s32 1, %s17
    $region7: #{tpu_custom_call.1} parent=1 // loop_footer_branch
      %16 = sbr.rel target = $region3
    $region8: #{tpu_custom_call.1} parent=1 // loop_exit
      _
    %867 = vsyncpa [#allocation3], 1
    %s868 = scalar_lea.sflag [#allocation3], 1
    %869 = vsyncpa %s868, 1
    %870 = vsyncpa [#allocation6], 1
    %871 = vsyncpa [#allocation4], 1
    %s872 = scalar_lea.sflag [#allocation4], 1
    %873 = vsyncpa %s872, 1

</llo_original>
